<compile_context>
chip_gen: v6e
topology: v6e:2x2x1
jax: 0.10.0
libtpu: 0.0.40
codegen_flags: <defaults>
</compile_context>

<pallas_src>
import math

import jax
import jax.numpy as jnp
from jax.experimental import pallas as pl
from jax.experimental.pallas import tpu as pltpu


def _round_up(x: int, m: int) -> int:
    return ((x + m - 1) // m) * m


def _linear_coupling_kernel(betas_ref, taus_ref, params_ref, out_ref):
    # betas/taus/out: (TB, LANE) streamed tiles; params: (3, LANE) resident.
    params = params_ref[...]
    alpha = params[0:1, :]   # (1, LANE) — broadcasts over the sublane axis
    gamma = params[1:2, :]
    delta = params[2:3, :]
    out_ref[...] = (alpha * betas_ref[...] + gamma * taus_ref[...] + delta).astype(
        out_ref.dtype
    )


def linear_coupling(gpcm_betas, coral_taus, alpha, gamma, delta):
    """Pallas implementation of LinearCoupling.forward.

    gpcm_betas, coral_taus: (batch, n_thresholds)
    alpha, gamma, delta:    (n_thresholds,)
    Returns (coupled, {'alpha', 'gamma', 'delta'}) matching the PyTorch module.
    """
    assert gpcm_betas.shape == coral_taus.shape
    b, t = gpcm_betas.shape
    dtype = gpcm_betas.dtype
    itemsize = jnp.dtype(dtype).itemsize
    params_dict = {"alpha": alpha, "gamma": gamma, "delta": delta}

    def ref_compute(bt, ct):
        return (alpha * bt + gamma * ct + delta).astype(dtype)

    # ---- Lane-dense grouping: g rows viewed as one row of g*t lanes. ------
    g = 128 // math.gcd(t, 128)          # g*t is a multiple of 128
    b_main = (b // g) * g
    if b_main == 0:
        # Too few rows to form even one lane-dense group — plain JAX is ideal.
        return ref_compute(gpcm_betas, coral_taus), params_dict

    lane = g * t
    rows = b_main // g

    # Contiguous row-major reshapes: free views, no HBM traffic.
    betas_main = gpcm_betas[:b_main].reshape(rows, lane)
    taus_main = coral_taus[:b_main].reshape(rows, lane)

    # Packed, group-tiled params: (3, lane). Tiny; cast once to stream dtype.
    params = jnp.stack(
        [jnp.tile(alpha, g), jnp.tile(gamma, g), jnp.tile(delta, g)]
    ).astype(dtype)

    # ---- Tile sizing from a per-buffer byte budget (~2 MiB). --------------
    bytes_per_row = lane * itemsize
    budget = 2 * 1024 * 1024
    tb_budget = max(8, (budget // bytes_per_row) // 8 * 8)
    tb = min(_round_up(rows, 8), tb_budget)
    if rows < tb:
        tb = rows  # block equals full array dim — satisfies (8,128) rule
    grid = (pl.cdiv(rows, tb),)  # ragged last block OK: pure elementwise

    stream_spec = pl.BlockSpec((tb, lane), lambda i: (i, 0))
    param_spec = pl.BlockSpec((3, lane), lambda i: (0, 0))  # fetched once

    cost = pl.CostEstimate(
        flops=4 * b_main * t,
        transcendentals=0,
        bytes_accessed=3 * b_main * t * itemsize,  # 2 reads + 1 write
    )

    coupled_main = pl.pallas_call(
        _linear_coupling_kernel,
        out_shape=jax.ShapeDtypeStruct((rows, lane), dtype),
        grid=grid,
        in_specs=[stream_spec, stream_spec, param_spec],
        out_specs=stream_spec,
        compiler_params=pltpu.CompilerParams(
            dimension_semantics=("parallel",),
        ),
        cost_estimate=cost,
    )(betas_main, taus_main, params).reshape(b_main, t)

    if b_main < b:
        # Leftover (< g) rows: handled in plain JAX, concatenated back.
        coupled_tail = ref_compute(gpcm_betas[b_main:], coral_taus[b_main:])
        coupled = jnp.concatenate([coupled_main, coupled_tail], axis=0)
    else:
        coupled = coupled_main

    return coupled, params_dict


if __name__ == "__main__":
    n_thresholds = 32
    batch = 8

    # Deterministic parameter init mirroring nn.Parameter(torch.ones/zeros(...)).
    alpha = jnp.ones((n_thresholds,), dtype=jnp.float32)
    gamma = jnp.ones((n_thresholds,), dtype=jnp.float32)
    delta = jnp.zeros((n_thresholds,), dtype=jnp.float32)

    key = jax.random.PRNGKey(0)
    k1, k2 = jax.random.split(key)
    gpcm_betas = jax.random.normal(k1, (batch, n_thresholds), dtype=jnp.float32)
    coral_taus = jax.random.normal(k2, (batch, n_thresholds), dtype=jnp.float32)

    coupled, params = linear_coupling(gpcm_betas, coral_taus, alpha, gamma, delta)
    jax.block_until_ready(coupled)

    # Reference check in plain JAX.
    ref = alpha * gpcm_betas + gamma * coral_taus + delta
    assert coupled.shape == ref.shape, "shape mismatch vs reference"
    assert jnp.allclose(coupled, ref, atol=1e-6), "mismatch vs reference"
    assert params["alpha"].shape == (n_thresholds,)

    print("KERNEL_OK")
</pallas_src>

<mosaic_0001>
module attributes {stable_mosaic.version = 11 : i64} {
  func.func @_linear_coupling_kernel(%arg0: i32, %arg1: memref<2x128xf32, #tpu.memory_space<vmem>>, %arg2: memref<2x128xf32, #tpu.memory_space<vmem>>, %arg3: memref<3x128xf32, #tpu.memory_space<vmem>>, %arg4: memref<2x128xf32, #tpu.memory_space<vmem>>) attributes {dimension_semantics = [#tpu.dimension_semantics<parallel>], iteration_bounds = array<i64: 1>, scalar_prefetch = 0 : i64, scratch_operands = 0 : i64, tpu.core_type = #tpu.core_type<tc>, window_params = [{transform_indices = @transform_0, window_bounds = array<i64: 2, 128>}, {transform_indices = @transform_1, window_bounds = array<i64: 2, 128>}, {pipeline_mode = #tpu.pipeline_mode<synchronous>, transform_indices = @transform_2, window_bounds = array<i64: 3, 128>}, {transform_indices = @transform_3, window_bounds = array<i64: 2, 128>}]} {
    %c0 = arith.constant 0 : index
    %c0_0 = arith.constant 0 : index
    %0 = vector.load %arg3[%c0, %c0_0] : memref<3x128xf32, #tpu.memory_space<vmem>>, vector<3x128xf32>
    %1 = vector.extract_strided_slice %0 {offsets = [0, 0], sizes = [1, 128], strides = [1, 1]} : vector<3x128xf32> to vector<1x128xf32>
    %2 = vector.extract_strided_slice %0 {offsets = [1, 0], sizes = [1, 128], strides = [1, 1]} : vector<3x128xf32> to vector<1x128xf32>
    %3 = vector.extract_strided_slice %0 {offsets = [2, 0], sizes = [1, 128], strides = [1, 1]} : vector<3x128xf32> to vector<1x128xf32>
    %c0_1 = arith.constant 0 : index
    %c0_2 = arith.constant 0 : index
    %4 = vector.load %arg1[%c0_1, %c0_2] : memref<2x128xf32, #tpu.memory_space<vmem>>, vector<2x128xf32>
    %5 = vector.broadcast %1 : vector<1x128xf32> to vector<2x128xf32>
    %6 = arith.mulf %5, %4 : vector<2x128xf32>
    %c0_3 = arith.constant 0 : index
    %c0_4 = arith.constant 0 : index
    %7 = vector.load %arg2[%c0_3, %c0_4] : memref<2x128xf32, #tpu.memory_space<vmem>>, vector<2x128xf32>
    %8 = vector.broadcast %2 : vector<1x128xf32> to vector<2x128xf32>
    %9 = arith.mulf %8, %7 : vector<2x128xf32>
    %10 = arith.addf %6, %9 : vector<2x128xf32>
    %11 = vector.broadcast %3 : vector<1x128xf32> to vector<2x128xf32>
    %12 = arith.addf %10, %11 : vector<2x128xf32>
    %c0_5 = arith.constant 0 : index
    %c0_6 = arith.constant 0 : index
    %13 = vector.load %arg4[%c0_5, %c0_6] : memref<2x128xf32, #tpu.memory_space<vmem>>, vector<2x128xf32>
    tpu.vector_store %arg4[%c0_5, %c0_6], %12 {strides = array<i32>} : memref<2x128xf32, #tpu.memory_space<vmem>>, vector<2x128xf32>,
    return
  }
  func.func @transform_0(%arg0: i32) -> (i32, i32) {
    %c0_i32 = arith.constant 0 : i32
    %c0_i32_0 = arith.constant 0 : i32
    return %arg0, %c0_i32 : i32, i32
  }
  func.func @transform_1(%arg0: i32) -> (i32, i32) {
    %c0_i32 = arith.constant 0 : i32
    %c0_i32_0 = arith.constant 0 : i32
    return %arg0, %c0_i32 : i32, i32
  }
  func.func @transform_2(%arg0: i32) -> (i32, i32) {
    %c0_i32 = arith.constant 0 : i32
    %c0_i32_0 = arith.constant 0 : i32
    %c0_i32_1 = arith.constant 0 : i32
    return %c0_i32, %c0_i32_0 : i32, i32
  }
  func.func @transform_3(%arg0: i32) -> (i32, i32) {
    %c0_i32 = arith.constant 0 : i32
    %c0_i32_0 = arith.constant 0 : i32
    return %arg0, %c0_i32 : i32, i32
  }
}

</mosaic_0001>

<llo_original>
// kernel: tpu_custom_call.1
$region0: #{tpu_custom_call.1}
  #allocation0 [shape = 'u32[]', space=smem, size = 0x4, offset = 0x4, fixed_abs, tag = 'smem constant byte address 0x4 - core index']
  #allocation1 [shape = 'u32[144,128]{1,0:T(1,128)}', space=vmem, size = 0x12000, scoped, tag = 'internal scratch']
  %s0 = inlined_call_operand.hbm [shape: f32[2,128], index: 0, kind: input, shape index: {}]
  %s1 = inlined_call_operand.hbm [shape: f32[2,128], index: 1, kind: input, shape index: {}]
  %s2 = inlined_call_operand.hbm [shape: f32[3,128], index: 2, kind: input, shape index: {}]
  %s3 = inlined_call_operand.hbm [shape: f32[2,128], index: 3, kind: output, shape index: {}]
  %s4 = sld [smem:[#allocation0]]
  $region34: #{tpu_custom_call.1} parent=0
    _
  %s6 = ssub.s32 1, %s4
  %s7 = scalar_select 0, %s6, %s4
  $region1: #{tpu_custom_call.1} parent=0
    #allocation2 [shape = 'u8[1024]{0}', space=vmem, size = 0x400, scoped, tag = 'input window, operand 0, single buffered']
    #allocation3 [shape = 's32[1]{0}', space=sflag, size = 0x4, scoped, tag = 'scoped memory for tpu_custom_call.1']
    #allocation4 [shape = 's32[1]{0}', space=sflag, size = 0x4, scoped, tag = 'scoped memory for tpu_custom_call.1']
    #allocation5 [shape = 'u8[1024]{0}', space=vmem, size = 0x400, scoped, tag = 'input window, operand 1, single buffered']
    #allocation6 [shape = 's32[1]{0}', space=sflag, size = 0x4, scoped, tag = 'scoped memory for tpu_custom_call.1']
    #allocation7 [shape = 'u8[2048]{0}', space=vmem, size = 0x800, scoped, tag = 'input window, operand 2, single buffered']
    #allocation8 [shape = 'u8[1024]{0}', space=vmem, size = 0x400, scoped, tag = 'output window, operand 0, single buffered']
    %8 = vsyncpa [#allocation3], 0
    %9 = vsyncpa [#allocation6], 0
    %10 = vsyncpa [#allocation4], 0
    // Predicated region
    $region2: #{tpu_custom_call.1} parent=1 // pred_check
      _
    $region3: #{tpu_custom_call.1} parent=1 // pred_check_branch
      %12 = sbr.rel (0) target = $region5
    $region4: #{tpu_custom_call.1} parent=1 // pred_region
      %s14 = ssub.s32 32, 32
      %15 = vsyncadd [#allocation3], %s14
      %s17 = sshll.u32 [#allocation2], 4
      %s18 = int_to_ptr.vmem [resolvable:$true] %s17
      %20 = dma.hbm_to_vmem [thread:$0]  %s0, 32, %s18, [#allocation3]
    $region5: #{tpu_custom_call.1} parent=1 // pred_fallthru
      _
    // Predicated region
    $region6: #{tpu_custom_call.1} parent=1 // pred_check
      _
    $region7: #{tpu_custom_call.1} parent=1 // pred_check_branch
      %22 = sbr.rel (0) target = $region9
    $region8: #{tpu_custom_call.1} parent=1 // pred_region
      %s24 = ssub.s32 32, 32
      %25 = vsyncadd [#allocation6], %s24
      %s27 = sshll.u32 [#allocation5], 4
      %s28 = int_to_ptr.vmem [resolvable:$true] %s27
      %30 = dma.hbm_to_vmem [thread:$0]  %s1, 32, %s28, [#allocation6]
    $region9: #{tpu_custom_call.1} parent=1 // pred_fallthru
      _
    // Predicated region
    $region10: #{tpu_custom_call.1} parent=1 // pred_check
      _
    $region11: #{tpu_custom_call.1} parent=1 // pred_check_branch
      %32 = sbr.rel (0) target = $region13
    $region12: #{tpu_custom_call.1} parent=1 // pred_region
      %s34 = ssub.s32 64, 64
      %35 = vsyncadd [#allocation6], %s34
      %s37 = sshll.u32 [#allocation7], 4
      %s38 = int_to_ptr.vmem [resolvable:$true] %s37
      %40 = dma.hbm_to_vmem [thread:$0]  %s2, 64, %s38, [#allocation6]
    $region13: #{tpu_custom_call.1} parent=1 // pred_fallthru
      _
    // Predicated region
    $region14: #{tpu_custom_call.1} parent=1 // pred_check
      _
    $region15: #{tpu_custom_call.1} parent=1 // pred_check_branch
      %42 = sbr.rel (0) target = $region17
    $region16: #{tpu_custom_call.1} parent=1 // pred_region
      %43 = dma.done [#allocation3], 32
    $region17: #{tpu_custom_call.1} parent=1 // pred_fallthru
      _
    // Predicated region
    $region18: #{tpu_custom_call.1} parent=1 // pred_check
      _
    $region19: #{tpu_custom_call.1} parent=1 // pred_check_branch
      %45 = sbr.rel (0) target = $region21
    $region20: #{tpu_custom_call.1} parent=1 // pred_region
      %46 = dma.done [#allocation6], 32
    $region21: #{tpu_custom_call.1} parent=1 // pred_fallthru
      _
    // Predicated region
    $region22: #{tpu_custom_call.1} parent=1 // pred_check
      _
    $region23: #{tpu_custom_call.1} parent=1 // pred_check_branch
      %48 = sbr.rel (0) target = $region25
    $region24: #{tpu_custom_call.1} parent=1 // pred_region
      %49 = dma.done [#allocation6], 64
    $region25: #{tpu_custom_call.1} parent=1 // pred_fallthru
      _
    %v50 = vld [vmem:[#allocation7] sm:$0x7]
    %v51 = vld [vmem:[#allocation2] sm:$0x3]
    %v52 = vlaneseq
    %v53 = vshrl.u32 %v52, 7
    %v54 = vsub.s32 0, %v53
    %v55 = vrot.slane %v50, %v54
    %v56 = vmul.f32 %v55, %v51
    %v57 = vld [vmem:[#allocation5] sm:$0x3]
    %v58 = vlaneseq
    %v59 = vshrl.u32 %v58, 7
    %v60 = vsub.s32 1, %v59
    %v61 = vrot.slane %v50, %v60
    %v62 = vmul.f32 %v61, %v57
    %v63 = vadd.f32 %v56, %v62
    %v64 = vlaneseq
    %v65 = vshrl.u32 %v64, 7
    %v66 = vsub.s32 2, %v65
    %v67 = vrot.slane %v50, %v66
    %v68 = vadd.f32 %v63, %v67
    %69 = vst [vmem:[#allocation8] sm:$0x3] %v68
    // Predicated region
    $region26: #{tpu_custom_call.1} parent=1 // pred_check
      _
    $region27: #{tpu_custom_call.1} parent=1 // pred_check_branch
      %71 = sbr.rel (0) target = $region29
    $region28: #{tpu_custom_call.1} parent=1 // pred_region
      %s73 = ssub.s32 32, 32
      %74 = vsyncadd [#allocation4], %s73
      %s76 = sshll.u32 [#allocation8], 4
      %s77 = int_to_ptr.vmem [resolvable:$true] %s76
      %79 = dma.vmem_to_hbm [thread:$0]  %s77, 32, %s3, [#allocation4]
    $region29: #{tpu_custom_call.1} parent=1 // pred_fallthru
      _
    // Predicated region
    $region30: #{tpu_custom_call.1} parent=1 // pred_check
      _
    $region31: #{tpu_custom_call.1} parent=1 // pred_check_branch
      %81 = sbr.rel (0) target = $region33
    $region32: #{tpu_custom_call.1} parent=1 // pred_region
      %82 = dma.done [#allocation4], 32
    $region33: #{tpu_custom_call.1} parent=1 // pred_fallthru
      _
    %83 = vsyncpa [#allocation3], 1
    %84 = vsyncpa [#allocation6], 1
    %85 = vsyncpa [#allocation4], 1

</llo_original>
